<compile_context>
chip_gen: v7x
topology: tpu7x:2x2x1
jax: 0.10.0
libtpu: 0.0.40
codegen_flags: <defaults>
</compile_context>

<pallas_src>
import math
from functools import partial

import jax
import jax.numpy as jnp
from jax.experimental import pallas as pl
from jax.experimental.pallas import tpu as pltpu


# ----------------------------------------------------------------------------
# Flash-style attention kernel over the selected queries.
# Grid: (batch, query-tile, key-tile); key-tile axis is the reduction.
# ----------------------------------------------------------------------------
def _query_selector_attn_kernel(q_ref, k_ref, v_ref, o_ref,
                                m_scr, l_scr, acc_scr, *, scale):
    # q_ref : (tile_u, D)    selected-query tile (native dtype, zero-padded rows)
    # k_ref : (tile_k, D)    key tile (native dtype)
    # v_ref : (tile_k, D_v)  value tile (native dtype)
    # o_ref : (tile_u, D_v)  attention output for the selected queries
    # m/l   : (tile_u, 1)    f32 running max / normalizer
    # acc   : (tile_u, D_v)  f32 running un-normalized output
    kt = pl.program_id(2)

    @pl.when(kt == 0)
    def _init():
        m_scr[...] = jnp.full_like(m_scr, -jnp.inf)
        l_scr[...] = jnp.zeros_like(l_scr)
        acc_scr[...] = jnp.zeros_like(acc_scr)

    # Fold 1/sqrt(D) into q (cheap: O(u*D)); keep native dtype into the MXU.
    q = q_ref[...] * scale
    s = jax.lax.dot_general(
        q, k_ref[...], dimension_numbers=(((1,), (1,)), ((), ())),
        preferred_element_type=jnp.float32)                      # (tile_u, tile_k) f32

    # Online softmax update (all statistics in f32).
    m_prev = m_scr[...]
    m_new = jnp.maximum(m_prev, jnp.max(s, axis=-1, keepdims=True))
    alpha = jnp.exp(m_prev - m_new)
    p = jnp.exp(s - m_new)                                        # (tile_u, tile_k) f32
    l_scr[...] = alpha * l_scr[...] + jnp.sum(p, axis=-1, keepdims=True)
    acc_scr[...] = alpha * acc_scr[...] + jnp.dot(
        p.astype(v_ref.dtype), v_ref[...], preferred_element_type=jnp.float32)
    m_scr[...] = m_new

    @pl.when(kt == pl.num_programs(2) - 1)
    def _finalize():
        inv_l = pl.reciprocal(l_scr[...], approx=True)            # EUP, ~free
        o_ref[...] = (acc_scr[...] * inv_l).astype(o_ref.dtype)


def _round_up(x, m):
    return ((x + m - 1) // m) * m


def _pick_key_tile(l_k):
    # Largest "nice" tile that divides L_K; fall back to the full extent
    # (full-extent blocks are always layout-legal).
    for c in (1024, 512, 256, 128, 64, 32, 16, 8):
        if c <= l_k and l_k % c == 0:
            return c
    return l_k


# ----------------------------------------------------------------------------
# Wrapper: top-k selection / gather / final row scatter in JAX, the heavy
# attention path (streamed K/V + online softmax) in Pallas.
# ----------------------------------------------------------------------------
def query_selector(queries, keys, values, attn_mask=None, *, fraction=0.33):
    # queries: (B, L_Q, D); keys: (B, L_K, D); values: (B, L_K, D_v)
    B, L_Q, D = queries.shape
    _, L_K, D_k = keys.shape
    D_v = values.shape[-1]
    assert D == D_k

    l_q = int((1.0 - fraction) * L_Q)
    assert l_q >= 1

    # ---- selection (top-k) stays in the wrapper -----------------------------
    # TODO(synk): top-k has no clean Pallas equivalent; kept in plain JAX.
    k_t = jnp.transpose(keys, (0, 2, 1))                                 # (B, D, L_K)
    k_reduce = jnp.mean(jax.lax.top_k(k_t, l_q)[0], axis=-1)             # (B, D)
    sqk = jnp.einsum('bd,bqd->bq', k_reduce, queries)                    # (B, L_Q)
    indices = jax.lax.top_k(sqk, l_q)[1].astype(jnp.int32)               # (B, l_q)
    q_sample = jnp.take_along_axis(queries, indices[..., None], axis=1)  # (B, l_q, D)

    # ---- tiling --------------------------------------------------------------
    tile_u = 128 if l_q > 128 else max(8, _round_up(l_q, 8))
    u_pad = _round_up(l_q, tile_u)
    if u_pad != l_q:
        # zero-padded rows just compute a harmless softmax; they are dropped below
        q_sample = jnp.pad(q_sample, ((0, 0), (0, u_pad - l_q), (0, 0)))
    tile_k = _pick_key_tile(L_K)
    n_u, n_k = u_pad // tile_u, L_K // tile_k

    scale = 1.0 / math.sqrt(D)
    in_bytes = jnp.dtype(queries.dtype).itemsize
    out_bytes = jnp.dtype(values.dtype).itemsize

    # VMEM budget for this tile plan (double-buffered inputs/output + scratch).
    vmem_est = (2 * (tile_u * D + tile_k * D + tile_k * D_v) * in_bytes
                + 2 * tile_u * D_v * out_bytes
                + tile_u * (D_v + 2) * 4)
    vmem_limit = int(min(max(2 * vmem_est, 16 * 1024 * 1024), 64 * 1024 * 1024))

    cost = pl.CostEstimate(
        flops=2 * B * u_pad * L_K * (D + D_v),
        transcendentals=B * u_pad * L_K,
        bytes_accessed=(B * u_pad * D * in_bytes + keys.size * in_bytes
                        + values.size * out_bytes + B * u_pad * D_v * out_bytes),
    )

    grid_spec = pltpu.PrefetchScalarGridSpec(
        num_scalar_prefetch=0,
        grid=(B, n_u, n_k),
        in_specs=[
            pl.BlockSpec((None, tile_u, D), lambda b, u, kt: (b, u, 0)),
            pl.BlockSpec((None, tile_k, D), lambda b, u, kt: (b, kt, 0)),
            pl.BlockSpec((None, tile_k, D_v), lambda b, u, kt: (b, kt, 0)),
        ],
        out_specs=pl.BlockSpec((None, tile_u, D_v), lambda b, u, kt: (b, u, 0)),
        scratch_shapes=[
            pltpu.VMEM((tile_u, 1), jnp.float32),     # running max m
            pltpu.VMEM((tile_u, 1), jnp.float32),     # running normalizer l
            pltpu.VMEM((tile_u, D_v), jnp.float32),   # running output acc
        ],
    )

    out_sel = pl.pallas_call(
        partial(_query_selector_attn_kernel, scale=scale),
        out_shape=jax.ShapeDtypeStruct((B, u_pad, D_v), values.dtype),
        grid_spec=grid_spec,
        compiler_params=pltpu.CompilerParams(
            dimension_semantics=("parallel", "parallel", "arbitrary"),
            vmem_limit_bytes=vmem_limit),
        cost_estimate=cost,
    )(q_sample, keys, values)                                            # (B, u_pad, D_v)

    # ---- combine: broadcast mean(V) base + scatter of the selected rows ----
    # (cheap functional update; replaces the O(L_Q * u_pad) one-hot matmul)
    mean_v = jnp.mean(values, axis=1)                                    # (B, D_v)
    result = jnp.broadcast_to(mean_v[:, None, :], (B, L_Q, D_v))
    b_idx = jnp.arange(B)[:, None]
    result = result.at[b_idx, indices].set(out_sel[:, :l_q, :].astype(result.dtype))
    return result, None


# ----------------------------------------------------------------------------
# Pure-JAX reference for a sanity check (mirrors the PyTorch forward).
# ----------------------------------------------------------------------------
def query_selector_ref(queries, keys, values, *, fraction=0.33):
    B, L_Q, D = queries.shape
    _, L_K, _ = keys.shape
    D_v = values.shape[-1]
    l_q = int((1.0 - fraction) * L_Q)
    k_t = jnp.transpose(keys, (0, 2, 1))
    k_reduce = jnp.mean(jax.lax.top_k(k_t, l_q)[0], axis=-1)
    sqk = jnp.einsum('bd,bqd->bq', k_reduce, queries)
    indices = jax.lax.top_k(sqk, l_q)[1]
    q_sample = jnp.take_along_axis(queries, indices[..., None], axis=1)
    scores = jnp.einsum('bud,bkd->buk', q_sample, keys) / math.sqrt(D)
    attn = jax.nn.softmax(scores, axis=-1)
    out = jnp.einsum('buk,bkd->bud', attn, values)
    mean_v = jnp.mean(values, axis=1)
    result = jnp.broadcast_to(mean_v[:, None, :], (B, L_Q, D_v))
    b_idx = jnp.arange(B)[:, None]
    result = result.at[b_idx, indices].set(out)
    return result


if __name__ == "__main__":
    B, L, D = 2, 16, 32
    key = jax.random.PRNGKey(0)
    kq, kk, kv = jax.random.split(key, 3)
    queries = jax.random.normal(kq, (B, L, D), dtype=jnp.float32)
    keys = jax.random.normal(kk, (B, L, D), dtype=jnp.float32)
    values = jax.random.normal(kv, (B, L, D), dtype=jnp.float32)

    result, attn = query_selector(queries, keys, values, attn_mask=None)
    result = jax.block_until_ready(result)

    ref = query_selector_ref(queries, keys, values)
    assert result.shape == (B, L, D)
    assert attn is None
    assert jnp.allclose(result, ref, atol=1e-2, rtol=1e-2), "mismatch vs JAX reference"

    print("KERNEL_OK")
</pallas_src>

<mosaic_0001>
module attributes {stable_mosaic.version = 11 : i64} {
  func.func @_query_selector_attn_kernel(%arg0: i32, %arg1: i32, %arg2: i32, %arg3: memref<1x16x32xf32, #tpu.memory_space<vmem>>, %arg4: memref<1x16x32xf32, #tpu.memory_space<vmem>>, %arg5: memref<1x16x32xf32, #tpu.memory_space<vmem>>, %arg6: memref<1x16x32xf32, #tpu.memory_space<vmem>>, %arg7: memref<16x1xf32, #tpu.memory_space<vmem>>, %arg8: memref<16x1xf32, #tpu.memory_space<vmem>>, %arg9: memref<16x32xf32, #tpu.memory_space<vmem>>) attributes {dimension_semantics = [#tpu.dimension_semantics<parallel>, #tpu.dimension_semantics<parallel>, #tpu.dimension_semantics<arbitrary>], iteration_bounds = array<i64: 2, 1, 1>, scalar_prefetch = 0 : i64, scratch_operands = 3 : i64, tpu.core_type = #tpu.core_type<tc>, window_params = [{transform_indices = @transform_0, window_bounds = array<i64: 1, 16, 32>}, {transform_indices = @transform_1, window_bounds = array<i64: 1, 16, 32>}, {transform_indices = @transform_2, window_bounds = array<i64: 1, 16, 32>}, {transform_indices = @transform_3, window_bounds = array<i64: 1, 16, 32>}]} {
    %c0_i32 = arith.constant 0 : i32
    %0 = arith.cmpi eq, %arg2, %c0_i32 : i32
    %1 = arith.extui %0 : i1 to i32
    %c0_i32_0 = arith.constant 0 : i32
    %2 = arith.cmpi ne, %1, %c0_i32_0 : i32
    scf.if %2 {
      %cst_27 = arith.constant 0xFF800000 : f32
      %37 = vector.broadcast %cst_27 : f32 to vector<16x1xf32>
      %c0_28 = arith.constant 0 : index
      %c0_29 = arith.constant 0 : index
      %38 = vector.load %arg7[%c0_28, %c0_29] : memref<16x1xf32, #tpu.memory_space<vmem>>, vector<16x1xf32>
      tpu.vector_store %arg7[%c0_28, %c0_29], %37 {strides = array<i32>} : memref<16x1xf32, #tpu.memory_space<vmem>>, vector<16x1xf32>,
      %cst_30 = arith.constant 0.000000e+00 : f32
      %39 = vector.broadcast %cst_30 : f32 to vector<16x1xf32>
      %c0_31 = arith.constant 0 : index
      %c0_32 = arith.constant 0 : index
      %40 = vector.load %arg8[%c0_31, %c0_32] : memref<16x1xf32, #tpu.memory_space<vmem>>, vector<16x1xf32>
      tpu.vector_store %arg8[%c0_31, %c0_32], %39 {strides = array<i32>} : memref<16x1xf32, #tpu.memory_space<vmem>>, vector<16x1xf32>,
      %cst_33 = arith.constant 0.000000e+00 : f32
      %41 = vector.broadcast %cst_33 : f32 to vector<16x32xf32>
      %c0_34 = arith.constant 0 : index
      %c0_35 = arith.constant 0 : index
      %42 = vector.load %arg9[%c0_34, %c0_35] : memref<16x32xf32, #tpu.memory_space<vmem>>, vector<16x32xf32>
      tpu.vector_store %arg9[%c0_34, %c0_35], %41 {strides = array<i32>} : memref<16x32xf32, #tpu.memory_space<vmem>>, vector<16x32xf32>,
    } else {
    }
    %c0 = arith.constant 0 : index
    %c0_1 = arith.constant 0 : index
    %c0_2 = arith.constant 0 : index
    %3 = vector.load %arg3[%c0, %c0_1, %c0_2] : memref<1x16x32xf32, #tpu.memory_space<vmem>>, vector<1x16x32xf32>
    %4 = vector.shape_cast %3 : vector<1x16x32xf32> to vector<16x32xf32>
    %cst = arith.constant 0.176776692 : f32
    %5 = vector.broadcast %cst : f32 to vector<16x32xf32>
    %6 = arith.mulf %4, %5 : vector<16x32xf32>
    %c0_3 = arith.constant 0 : index
    %c0_4 = arith.constant 0 : index
    %c0_5 = arith.constant 0 : index
    %7 = vector.load %arg4[%c0_3, %c0_4, %c0_5] : memref<1x16x32xf32, #tpu.memory_space<vmem>>, vector<1x16x32xf32>
    %8 = vector.shape_cast %7 : vector<1x16x32xf32> to vector<16x32xf32>
    %cst_6 = arith.constant dense<0.000000e+00> : vector<16x16xf32>
    %9 = tpu.matmul %6, %8, %cst_6 {dimension_numbers = #tpu.dot_dimension_numbers<[1], [1], [0], [0], [0, 0, 1, 0], [], []>} : vector<16x32xf32>, vector<16x32xf32>, vector<16x16xf32> -> vector<16x16xf32>
    %c0_7 = arith.constant 0 : index
    %c0_8 = arith.constant 0 : index
    %10 = vector.load %arg7[%c0_7, %c0_8] : memref<16x1xf32, #tpu.memory_space<vmem>>, vector<16x1xf32>
    %cst_9 = arith.constant dense<0xFF800000> : vector<16xf32>
    %11 = vector.multi_reduction <maximumf>, %9, %cst_9 [1] : vector<16x16xf32> to vector<16xf32>
    %12 = vector.shape_cast %11 : vector<16xf32> to vector<16x1xf32>
    %13 = arith.maximumf %10, %12 : vector<16x1xf32>
    %14 = arith.subf %10, %13 : vector<16x1xf32>
    %15 = math.exp %14 : vector<16x1xf32>
    %16 = vector.broadcast %13 : vector<16x1xf32> to vector<16x16xf32>
    %17 = arith.subf %9, %16 : vector<16x16xf32>
    %18 = math.exp %17 : vector<16x16xf32>
    %c0_10 = arith.constant 0 : index
    %c0_11 = arith.constant 0 : index
    %19 = vector.load %arg8[%c0_10, %c0_11] : memref<16x1xf32, #tpu.memory_space<vmem>>, vector<16x1xf32>
    %20 = arith.mulf %15, %19 : vector<16x1xf32>
    %cst_12 = arith.constant dense<0.000000e+00> : vector<16xf32>
    %21 = vector.multi_reduction <add>, %18, %cst_12 [1] : vector<16x16xf32> to vector<16xf32>
    %22 = vector.shape_cast %21 : vector<16xf32> to vector<16x1xf32>
    %23 = arith.addf %20, %22 : vector<16x1xf32>
    %c0_13 = arith.constant 0 : index
    %c0_14 = arith.constant 0 : index
    %24 = vector.load %arg8[%c0_13, %c0_14] : memref<16x1xf32, #tpu.memory_space<vmem>>, vector<16x1xf32>
    tpu.vector_store %arg8[%c0_13, %c0_14], %23 {strides = array<i32>} : memref<16x1xf32, #tpu.memory_space<vmem>>, vector<16x1xf32>,
    %c0_15 = arith.constant 0 : index
    %c0_16 = arith.constant 0 : index
    %25 = vector.load %arg9[%c0_15, %c0_16] : memref<16x32xf32, #tpu.memory_space<vmem>>, vector<16x32xf32>
    %26 = vector.broadcast %15 : vector<16x1xf32> to vector<16x32xf32>
    %27 = arith.mulf %26, %25 : vector<16x32xf32>
    %c0_17 = arith.constant 0 : index
    %c0_18 = arith.constant 0 : index
    %c0_19 = arith.constant 0 : index
    %28 = vector.load %arg5[%c0_17, %c0_18, %c0_19] : memref<1x16x32xf32, #tpu.memory_space<vmem>>, vector<1x16x32xf32>
    %29 = vector.shape_cast %28 : vector<1x16x32xf32> to vector<16x32xf32>
    %cst_20 = arith.constant dense<0.000000e+00> : vector<16x32xf32>
    %30 = tpu.matmul %18, %29, %cst_20 {dimension_numbers = #tpu.dot_dimension_numbers<[1], [0], [0], [1], [0, 0, 1, 1], [], []>} : vector<16x16xf32>, vector<16x32xf32>, vector<16x32xf32> -> vector<16x32xf32>
    %31 = arith.addf %27, %30 : vector<16x32xf32>
    %c0_21 = arith.constant 0 : index
    %c0_22 = arith.constant 0 : index
    %32 = vector.load %arg9[%c0_21, %c0_22] : memref<16x32xf32, #tpu.memory_space<vmem>>, vector<16x32xf32>
    tpu.vector_store %arg9[%c0_21, %c0_22], %31 {strides = array<i32>} : memref<16x32xf32, #tpu.memory_space<vmem>>, vector<16x32xf32>,
    %c0_23 = arith.constant 0 : index
    %c0_24 = arith.constant 0 : index
    %33 = vector.load %arg7[%c0_23, %c0_24] : memref<16x1xf32, #tpu.memory_space<vmem>>, vector<16x1xf32>
    tpu.vector_store %arg7[%c0_23, %c0_24], %13 {strides = array<i32>} : memref<16x1xf32, #tpu.memory_space<vmem>>, vector<16x1xf32>,
    %c0_i32_25 = arith.constant 0 : i32
    %34 = arith.cmpi eq, %arg2, %c0_i32_25 : i32
    %35 = arith.extui %34 : i1 to i32
    %c0_i32_26 = arith.constant 0 : i32
    %36 = arith.cmpi ne, %35, %c0_i32_26 : i32
    scf.if %36 {
      %c0_27 = arith.constant 0 : index
      %c0_28 = arith.constant 0 : index
      %37 = vector.load %arg8[%c0_27, %c0_28] : memref<16x1xf32, #tpu.memory_space<vmem>>, vector<16x1xf32>
      %38 = tpu.reciprocal %37 {approx = true} : vector<16x1xf32> -> vector<16x1xf32>
      %c0_29 = arith.constant 0 : index
      %c0_30 = arith.constant 0 : index
      %39 = vector.load %arg9[%c0_29, %c0_30] : memref<16x32xf32, #tpu.memory_space<vmem>>, vector<16x32xf32>
      %40 = vector.broadcast %38 : vector<16x1xf32> to vector<16x32xf32>
      %41 = arith.mulf %39, %40 : vector<16x32xf32>
      %c0_31 = arith.constant 0 : index
      %c0_32 = arith.constant 0 : index
      %c0_33 = arith.constant 0 : index
      %42 = vector.load %arg6[%c0_31, %c0_32, %c0_33] : memref<1x16x32xf32, #tpu.memory_space<vmem>>, vector<1x16x32xf32>
      %43 = vector.shape_cast %42 : vector<1x16x32xf32> to vector<16x32xf32>
      %44 = vector.shape_cast %41 : vector<16x32xf32> to vector<1x16x32xf32>
      tpu.vector_store %arg6[%c0_31, %c0_32, %c0_33], %44 {strides = array<i32>} : memref<1x16x32xf32, #tpu.memory_space<vmem>>, vector<1x16x32xf32>,
    } else {
    }
    return
  }
  func.func @transform_0(%arg0: i32, %arg1: i32, %arg2: i32) -> (i32, i32, i32) {
    %c0_i32 = arith.constant 0 : i32
    %c0_i32_0 = arith.constant 0 : i32
    return %arg0, %arg1, %c0_i32 : i32, i32, i32
  }
  func.func @transform_1(%arg0: i32, %arg1: i32, %arg2: i32) -> (i32, i32, i32) {
    %c0_i32 = arith.constant 0 : i32
    %c0_i32_0 = arith.constant 0 : i32
    return %arg0, %arg2, %c0_i32 : i32, i32, i32
  }
  func.func @transform_2(%arg0: i32, %arg1: i32, %arg2: i32) -> (i32, i32, i32) {
    %c0_i32 = arith.constant 0 : i32
    %c0_i32_0 = arith.constant 0 : i32
    return %arg0, %arg2, %c0_i32 : i32, i32, i32
  }
  func.func @transform_3(%arg0: i32, %arg1: i32, %arg2: i32) -> (i32, i32, i32) {
    %c0_i32 = arith.constant 0 : i32
    %c0_i32_0 = arith.constant 0 : i32
    return %arg0, %arg1, %c0_i32 : i32, i32, i32
  }
}

</mosaic_0001>

<llo_original>
// kernel: tpu_custom_call.1
$region0: #{tpu_custom_call.1}
  #allocation0 [shape = 'u32[]', space=smem, size = 0x4, offset = 0x4, fixed_abs, tag = 'smem constant byte address 0x4 - core index']
  #allocation1 [shape = 'u32[144,128]{1,0:T(1,128)}', space=vmem, size = 0x12000, scoped, tag = 'internal scratch']
  #allocation2 [shape = 'f32[16,1]{1,0:T(8,128)}', space=vmem, size = 0x2000, scoped, tag = 'scratch operand']
  #allocation3 [shape = 'f32[16,1]{1,0:T(8,128)}', space=vmem, size = 0x2000, scoped, tag = 'scratch operand']
  #allocation4 [shape = 'f32[16,32]{1,0:T(8,128)}', space=vmem, size = 0x2000, scoped, tag = 'scratch operand']
  %s0 = inlined_call_operand.hbm [shape: f32[2,16,32], index: 0, kind: input, shape index: {}]
  %s1 = inlined_call_operand.hbm [shape: f32[2,16,32], index: 1, kind: input, shape index: {}]
  %s2 = inlined_call_operand.hbm [shape: f32[2,16,32], index: 2, kind: input, shape index: {}]
  %s3 = inlined_call_operand.hbm [shape: f32[2,16,32], index: 3, kind: output, shape index: {}]
  %s4 = sld [smem:[#allocation0]]
  $region65: #{tpu_custom_call.1} parent=0
    _
  %s6 = ssub.s32 1, %s4
  %s7 = scalar_select 0, %s6, %s4
  $region1: #{tpu_custom_call.1} parent=0
    #allocation5 [shape = 'u8[16384]{0}', space=vmem, size = 0x4000, scoped, tag = 'input window, operand 0']
    #allocation6 [shape = 's32[2]{0}', space=sflag, size = 0x8, scoped, tag = 'scoped memory for tpu_custom_call.1']
    #allocation7 [shape = 's32[2]{0}', space=sflag, size = 0x8, scoped, tag = 'scoped memory for tpu_custom_call.1']
    #allocation8 [shape = 'u8[16384]{0}', space=vmem, size = 0x4000, scoped, tag = 'input window, operand 1']
    #allocation9 [shape = 's32[2]{0}', space=sflag, size = 0x8, scoped, tag = 'scoped memory for tpu_custom_call.1']
    #allocation10 [shape = 'u8[16384]{0}', space=vmem, size = 0x4000, scoped, tag = 'input window, operand 2']
    #allocation11 [shape = 'u8[16384]{0}', space=vmem, size = 0x4000, scoped, tag = 'output window, operand 0']
    %8 = vsyncpa [#allocation6], 0
    %s9 = scalar_lea.sflag [#allocation6], 1
    %10 = vsyncpa %s9, 0
    %11 = vsyncpa [#allocation9], 0
    %s12 = scalar_lea.sflag [#allocation9], 1
    %13 = vsyncpa %s12, 0
    %14 = vsyncpa [#allocation7], 0
    %s15 = scalar_lea.sflag [#allocation7], 1
    %16 = vsyncpa %s15, 0
    loop: start=0, step=1, limit=4
    $region2: #{tpu_custom_call.1} parent=1 // loop_pre_header
      _
    $region3: #{tpu_custom_call.1} parent=1 // loop_header
      %s18 = sphi 0, %s22
      %p19 = scmp.ge.s32.totalorder %s18, 4
      %s25 = sphi 0, %s44
      %s26 = sphi 0, %s40
      %s27 = sphi 0, %s36
      %s28 = sphi 0, %s25
      %s29 = sphi 0, %s26
      %s30 = sphi 0, %s27
      %s31 = sphi 0, %s28
      %s32 = sphi 0, %s29
      %s33 = sphi 0, %s30
      %s49 = sphi 0, %s51
      %s52 = sphi 0, %s49
      %s53 = sphi 0, %s52
      %s69 = sphi 0, %s53
      %s77 = sphi 0, %s79
      %s80 = sphi 0, %s77
      %s81 = sphi 0, %s80
      %s97 = sphi 0, %s81
      %s105 = sphi 0, %s107
      %s108 = sphi 0, %s105
      %s109 = sphi 0, %s108
      %s125 = sphi 0, %s109
      %s133 = sphi 0, %s135
      %s136 = sphi 0, %s133
      %s137 = sphi 0, %s136
      %s153 = sphi 0, %s137
    $region4: #{tpu_custom_call.1} parent=1 // loop_header_branch
      %21 = sbr.rel (%p19) target = $region8
    $region5: #{tpu_custom_call.1} parent=1 // loop_body
      %s23 = ssub.s32 %s18, 1
      %s24 = ssub.s32 %s18, 2
      %s34 = sadd.s32 1, %s27
      %p35 = scmp.ge.s32.totalorder %s34, 1
      %s36 = scalar_select %p35, 0, %s34
      %s37 = sadd.s32 1, %s26
      %s38 = scalar_select %p35, %s37, %s26
      %p39 = scmp.ge.s32.totalorder %s38, 1
      %s40 = scalar_select %p39, 0, %s38
      %s41 = sadd.s32 1, %s25
      %s42 = scalar_select %p39, %s41, %s25
      %p43 = scmp.ge.s32.totalorder %s42, 2
      %s44 = scalar_select %p43, 0, %s42
      %s45 = ssub.s32 %s25, %s44
      %s46 = ssub.s32 %s26, %s40
      %s47 = sor.u32 %s45, %s46
      %p48 = scmp.eq.s32.totalorder %s47, 0
      %s50 = sadd.s32 %s49, 1
      %s51 = scalar_select %p48, %s49, %s50
      %p54 = pneg %p48
      %p55 = scmp.eq.s32.totalorder %s18, 1
      %p56 = por %p54, %p55
      %p57 = scmp.ne.s32.totalorder %s49, %s52
      %p58 = scmp.eq.s32.totalorder %s18, 0
      %p59 = por %p57, %p58
      %p60 = scmp.ne.s32.totalorder %s49, %s52
      %p61 = scmp.eq.s32.totalorder %s23, 1
      %p62 = por %p60, %p61
      %p63 = scmp.ne.s32.totalorder %s52, %s53
      %p64 = scmp.eq.s32.totalorder %s23, 0
      %p65 = por %p63, %p64
      %p66 = scmp.ne.s32.totalorder %s52, %s53
      %p67 = scmp.eq.s32.totalorder %s24, 1
      %p68 = por %p66, %p67
      %p70 = scmp.ne.s32.totalorder %s53, %s69
      %p71 = scmp.eq.s32.totalorder %s24, 0
      %p72 = por %p70, %p71
      %s73 = ssub.s32 %s25, %s44
      %s74 = ssub.s32 %s27, %s36
      %s75 = sor.u32 %s73, %s74
      %p76 = scmp.eq.s32.totalorder %s75, 0
      %s78 = sadd.s32 %s77, 1
      %s79 = scalar_select %p76, %s77, %s78
      %p82 = pneg %p76
      %p83 = scmp.eq.s32.totalorder %s18, 1
      %p84 = por %p82, %p83
      %p85 = scmp.ne.s32.totalorder %s77, %s80
      %p86 = scmp.eq.s32.totalorder %s18, 0
      %p87 = por %p85, %p86
      %p88 = scmp.ne.s32.totalorder %s77, %s80
      %p89 = scmp.eq.s32.totalorder %s23, 1
      %p90 = por %p88, %p89
      %p91 = scmp.ne.s32.totalorder %s80, %s81
      %p92 = scmp.eq.s32.totalorder %s23, 0
      %p93 = por %p91, %p92
      %p94 = scmp.ne.s32.totalorder %s80, %s81
      %p95 = scmp.eq.s32.totalorder %s24, 1
      %p96 = por %p94, %p95
      %p98 = scmp.ne.s32.totalorder %s81, %s97
      %p99 = scmp.eq.s32.totalorder %s24, 0
      %p100 = por %p98, %p99
      %s101 = ssub.s32 %s25, %s44
      %s102 = ssub.s32 %s27, %s36
      %s103 = sor.u32 %s101, %s102
      %p104 = scmp.eq.s32.totalorder %s103, 0
      %s106 = sadd.s32 %s105, 1
      %s107 = scalar_select %p104, %s105, %s106
      %p110 = pneg %p104
      %p111 = scmp.eq.s32.totalorder %s18, 1
      %p112 = por %p110, %p111
      %p113 = scmp.ne.s32.totalorder %s105, %s108
      %p114 = scmp.eq.s32.totalorder %s18, 0
      %p115 = por %p113, %p114
      %p116 = scmp.ne.s32.totalorder %s105, %s108
      %p117 = scmp.eq.s32.totalorder %s23, 1
      %p118 = por %p116, %p117
      %p119 = scmp.ne.s32.totalorder %s108, %s109
      %p120 = scmp.eq.s32.totalorder %s23, 0
      %p121 = por %p119, %p120
      %p122 = scmp.ne.s32.totalorder %s108, %s109
      %p123 = scmp.eq.s32.totalorder %s24, 1
      %p124 = por %p122, %p123
      %p126 = scmp.ne.s32.totalorder %s109, %s125
      %p127 = scmp.eq.s32.totalorder %s24, 0
      %p128 = por %p126, %p127
      %s129 = ssub.s32 %s25, %s44
      %s130 = ssub.s32 %s26, %s40
      %s131 = sor.u32 %s129, %s130
      %p132 = scmp.eq.s32.totalorder %s131, 0
      %s134 = sadd.s32 %s133, 1
      %s135 = scalar_select %p132, %s133, %s134
      %p138 = pneg %p132
      %p139 = scmp.eq.s32.totalorder %s18, 1
      %p140 = por %p138, %p139
      %p141 = scmp.ne.s32.totalorder %s133, %s136
      %p142 = scmp.eq.s32.totalorder %s18, 0
      %p143 = por %p141, %p142
      %p144 = scmp.ne.s32.totalorder %s133, %s136
      %p145 = scmp.eq.s32.totalorder %s23, 1
      %p146 = por %p144, %p145
      %p147 = scmp.ne.s32.totalorder %s136, %s137
      %p148 = scmp.eq.s32.totalorder %s23, 0
      %p149 = por %p147, %p148
      %p150 = scmp.ne.s32.totalorder %s136, %s137
      %p151 = scmp.eq.s32.totalorder %s24, 1
      %p152 = por %p150, %p151
      %p154 = scmp.ne.s32.totalorder %s137, %s153
      %p155 = scmp.eq.s32.totalorder %s24, 0
      %p156 = por %p154, %p155
      %p157 = scmp.le.s32.totalorder 1, %s18
      %p158 = scmp.lt.s32.totalorder %s18, 3
      %p159 = pnand %p157, %p158
      %p160 = pneg %p159
      // Predicated region
      $region9: #{tpu_custom_call.1} parent=5 // pred_check
        _
      $region10: #{tpu_custom_call.1} parent=5 // pred_check_branch
        %162 = sbr.rel (%p159) target = $region12
      $region11: #{tpu_custom_call.1} parent=5 // pred_region
        %s163 = ssub.s32 %s18, 1
      $region12: #{tpu_custom_call.1} parent=5 // pred_fallthru
        _
      %p164 = scmp.lt.s32.totalorder %s18, 2
      // Predicated region
      $region13: #{tpu_custom_call.1} parent=5 // pred_check
        %p165 = pneg %p164
      $region14: #{tpu_custom_call.1} parent=5 // pred_check_branch
        %167 = sbr.rel (%p165) target = $region16
      $region15: #{tpu_custom_call.1} parent=5 // pred_region
        // Predicated region
        $region17: #{tpu_custom_call.1} parent=15 // pred_check
          %p168 = pneg %p59
        $region18: #{tpu_custom_call.1} parent=15 // pred_check_branch
          %170 = sbr.rel (%p168) target = $region20
        $region19: #{tpu_custom_call.1} parent=15 // pred_region
          %s171 = sand.u32 %s49, 1
          %s172 = scalar_lea.sflag [#allocation6], %s171
          %s173 = sand.u32 %s49, 1
          %s174 = smul.addr %s173, 16
          %s175 = scalar_lea.vmem [#allocation5], %s174
          %s176 = smul.u32 2, %s26
          %s178 = ssub.s32 256, 256
          %179 = vsyncadd %s172, %s178
          %s180 = smul.addr %s25, 2
          %s181 = sadd.s32 %s176, %s180
          %s182 = smul.addr %s181, 128
          %s183 = scalar_lea.hbm %s0, %s182
          %s184 = sshll.u32 %s175, 4
          %s185 = int_to_ptr.vmem [resolvable:$true] %s184
          %190 = dma.hbm_to_vmem [thread:$0]  %s183, 256, %s185, %s172, 128, 128, 8
        $region20: #{tpu_custom_call.1} parent=15 // pred_fallthru
          _
        // Predicated region
        $region21: #{tpu_custom_call.1} parent=15 // pred_check
          %p191 = pneg %p87
        $region22: #{tpu_custom_call.1} parent=15 // pred_check_branch
          %193 = sbr.rel (%p191) target = $region24
        $region23: #{tpu_custom_call.1} parent=15 // pred_region
          %s194 = sand.u32 %s18, 1
          %s195 = scalar_lea.sflag [#allocation9], %s194
          %s196 = sand.u32 %s77, 1
          %s197 = smul.addr %s196, 16
          %s198 = scalar_lea.vmem [#allocation8], %s197
          %s199 = smul.u32 2, %s27
          %s201 = ssub.s32 256, 256
          %202 = vsyncadd %s195, %s201
          %s203 = smul.addr %s25, 2
          %s204 = sadd.s32 %s199, %s203
          %s205 = smul.addr %s204, 128
          %s206 = scalar_lea.hbm %s1, %s205
          %s207 = sshll.u32 %s198, 4
          %s208 = int_to_ptr.vmem [resolvable:$true] %s207
          %213 = dma.hbm_to_vmem [thread:$0]  %s206, 256, %s208, %s195, 128, 128, 8
        $region24: #{tpu_custom_call.1} parent=15 // pred_fallthru
          _
        // Predicated region
        $region25: #{tpu_custom_call.1} parent=15 // pred_check
          %p214 = pneg %p115
        $region26: #{tpu_custom_call.1} parent=15 // pred_check_branch
          %216 = sbr.rel (%p214) target = $region28
        $region27: #{tpu_custom_call.1} parent=15 // pred_region
          %s217 = sand.u32 %s18, 1
          %s218 = scalar_lea.sflag [#allocation9], %s217
          %s219 = sand.u32 %s105, 1
          %s220 = smul.addr %s219, 16
          %s221 = scalar_lea.vmem [#allocation10], %s220
          %s222 = smul.u32 2, %s27
          %s224 = ssub.s32 256, 256
          %225 = vsyncadd %s218, %s224
          %s226 = smul.addr %s25, 2
          %s227 = sadd.s32 %s222, %s226
          %s228 = smul.addr %s227, 128
          %s229 = scalar_lea.hbm %s2, %s228
          %s230 = sshll.u32 %s221, 4
          %s231 = int_to_ptr.vmem [resolvable:$true] %s230
          %236 = dma.hbm_to_vmem [thread:$0]  %s229, 256, %s231, %s218, 128, 128, 8
        $region28: #{tpu_custom_call.1} parent=15 // pred_fallthru
          _
      $region16: #{tpu_custom_call.1} parent=5 // pred_fallthru
        _
      %p237 = scmp.le.s32.totalorder 1, %s18
      %p238 = scmp.lt.s32.totalorder %s18, 3
      %p239 = pnand %p237, %p238
      %p240 = pneg %p239
      // Predicated region
      $region29: #{tpu_custom_call.1} parent=5 // pred_check
        _
      $region30: #{tpu_custom_call.1} parent=5 // pred_check_branch
        %242 = sbr.rel (%p239) target = $region32
      $region31: #{tpu_custom_call.1} parent=5 // pred_region
        %s243 = ssub.s32 %s18, 1
        %s244 = sand.u32 %s52, 1
        %s245 = scalar_lea.sflag [#allocation6], %s244
        %s246 = sand.u32 %s52, 1
        %s247 = smul.addr %s246, 16
        %s248 = scalar_lea.vmem [#allocation5], %s247
        // Predicated region
        $region33: #{tpu_custom_call.1} parent=31 // pred_check
          %p249 = pneg %p65
        $region34: #{tpu_custom_call.1} parent=31 // pred_check_branch
          %251 = sbr.rel (%p249) target = $region36
        $region35: #{tpu_custom_call.1} parent=31 // pred_region
          %252 = dma.done %s245, 256
        $region36: #{tpu_custom_call.1} parent=31 // pred_fallthru
          _
        %s253 = sand.u32 %s23, 1
        %s254 = scalar_lea.sflag [#allocation9], %s253
        %s255 = sand.u32 %s80, 1
        %s256 = smul.addr %s255, 16
        %s257 = scalar_lea.vmem [#allocation8], %s256
        // Predicated region
        $region37: #{tpu_custom_call.1} parent=31 // pred_check
          %p258 = pneg %p93
        $region38: #{tpu_custom_call.1} parent=31 // pred_check_branch
          %260 = sbr.rel (%p258) target = $region40
        $region39: #{tpu_custom_call.1} parent=31 // pred_region
          %261 = dma.done %s254, 256
        $region40: #{tpu_custom_call.1} parent=31 // pred_fallthru
          _
        %s262 = sand.u32 %s23, 1
        %s263 = scalar_lea.sflag [#allocation9], %s262
        %s264 = sand.u32 %s108, 1
        %s265 = smul.addr %s264, 16
        %s266 = scalar_lea.vmem [#allocation10], %s265
        // Predicated region
        $region41: #{tpu_custom_call.1} parent=31 // pred_check
          %p267 = pneg %p121
        $region42: #{tpu_custom_call.1} parent=31 // pred_check_branch
          %269 = sbr.rel (%p267) target = $region44
        $region43: #{tpu_custom_call.1} parent=31 // pred_region
          %270 = dma.done %s263, 256
        $region44: #{tpu_custom_call.1} parent=31 // pred_fallthru
          _
        %s271 = sand.u32 %s52, 1
        %s272 = scalar_lea.sflag [#allocation6], %s271
        %s273 = sand.u32 %s52, 1
        %s274 = smul.addr %s273, 16
        %s275 = scalar_lea.vmem [#allocation5], %s274
        %p276 = pneg %p65
        %p277 = pneg %p62
        %s278 = sand.u32 %s23, 1
        %s279 = scalar_lea.sflag [#allocation9], %s278
        %s280 = sand.u32 %s80, 1
        %s281 = smul.addr %s280, 16
        %s282 = scalar_lea.vmem [#allocation8], %s281
        %p283 = pneg %p93
        %p284 = pneg %p90
        %s285 = sand.u32 %s23, 1
        %s286 = scalar_lea.sflag [#allocation9], %s285
        %s287 = sand.u32 %s108, 1
        %s288 = smul.addr %s287, 16
        %s289 = scalar_lea.vmem [#allocation10], %s288
        %p290 = pneg %p121
        %p291 = pneg %p118
        %p292 = pneg %p149
        %p293 = pneg %p146
        %s294 = sand.u32 %s136, 1
        %s295 = scalar_lea.sflag [#allocation7], %s294
        %s296 = sand.u32 %s136, 1
        %s297 = smul.addr %s296, 16
        %s298 = scalar_lea.vmem [#allocation11], %s297
        %s299 = smul.u32 2, %s29
        %s300 = smul.u32 2, %s30
        %s301 = smul.u32 2, %s30
        %s302 = smul.u32 2, %s29
        %p303 = scmp.eq.s32.totalorder %s30, 0
        // Predicated region
        $region45: #{tpu_custom_call.1} parent=31 // pred_check
          %p304 = pneg %p303
        $region46: #{tpu_custom_call.1} parent=31 // pred_check_branch
          %306 = sbr.rel (%p304) target = $region48
        $region47: #{tpu_custom_call.1} parent=31 // pred_region
          %vm307 = vcmask 7168
          %308 = vst.msk [vmem:[#allocation2] sm:$0xff] %vm307, -inf
          %309 = vst.msk [vmem:[#allocation2 + $0x8] sm:$0xff] %vm307, -inf
          %310 = vst.msk [vmem:[#allocation3] sm:$0xff] %vm307, 0.0
          %311 = vst.msk [vmem:[#allocation3 + $0x8] sm:$0xff] %vm307, 0.0
          %vm312 = vcmask 261120
          %313 = vst.msk [vmem:[#allocation4] sm:$0xff] %vm312, 0.0
          %314 = vst.msk [vmem:[#allocation4 + $0x8] sm:$0xff] %vm312, 0.0
        $region48: #{tpu_custom_call.1} parent=31 // pred_fallthru
          _
        %v315 = vld [vmem:[%s248] sm:$0xff]
        %v316 = vld [vmem:[%s248 + $0x8] sm:$0xff]
        %v317 = vmul.f32 %v315, 0.17677669
        %v318 = vmul.f32 %v316, 0.17677669
        %v319 = vld [vmem:[%s257] sm:$0xff]
        %v320 = vld [vmem:[%s257 + $0x8] sm:$0xff]
        %vm321 = vcmask 261120
        %v323 = vsel %vm321, %v317, 0
        %v326 = vsel %vm321, %v318, 0
        %v329 = vsel %vm321, %v319, 0
        %v332 = vsel %vm321, %v320, 0
        %334 = vmatprep.subr.mxu0 0.0
        %335 = vmatpush1.xpose.msra.mxu0 %v329
        %336 = vmatprep.subr.mxu0 0.0
        %337 = vmatpush1.xpose.msra.mxu0 %v332
        %338 = vmatprep.subr.mxu0 0.0
        %339 = vmatpush1.xpose.msra.mxu0 0.0
        %340 = vmatprep.subr.mxu0 0.0
        %341 = vmatpush1.xpose.msra.mxu0 0.0
        %342 = vmatprep.subr.mxu0 0.0
        %343 = vmatpush1.xpose.msra.mxu0 0.0
        %344 = vmatprep.subr.mxu0 0.0
        %345 = vmatpush1.xpose.msra.mxu0 0.0
        %346 = vmatprep.subr.mxu0 0.0
        %347 = vmatpush1.xpose.msra.mxu0 0.0
        %348 = vmatprep.subr.mxu0 0.0
        %349 = vmatpush1.xpose.msra.mxu0 0.0
        %350 = vmatprep.subr.mxu0 0.0
        %351 = vmatpush1.xpose.msra.mxu0 0.0
        %352 = vmatprep.subr.mxu0 0.0
        %353 = vmatpush1.xpose.msra.mxu0 0.0
        %354 = vmatprep.subr.mxu0 0.0
        %355 = vmatpush1.xpose.msra.mxu0 0.0
        %356 = vmatprep.subr.mxu0 0.0
        %357 = vmatpush1.xpose.msra.mxu0 0.0
        %358 = vmatprep.subr.mxu0 0.0
        %359 = vmatpush1.xpose.msra.mxu0 0.0
        %360 = vmatprep.subr.mxu0 0.0
        %361 = vmatpush1.xpose.msra.mxu0 0.0
        %362 = vmatprep.subr.mxu0 0.0
        %363 = vmatpush1.xpose.msra.mxu0 0.0
        %364 = vmatprep.subr.mxu0 0.0
        %365 = vmatpush1.xpose.msra.mxu0 0.0
        %366 = vmatprep.subr.mxu0 0.0
        %367 = vmatpush1.xpose.msra.mxu0 0.0
        %368 = vmatprep.subr.mxu0 0.0
        %369 = vmatpush1.xpose.msra.mxu0 0.0
        %370 = vmatprep.subr.mxu0 0.0
        %371 = vmatpush1.xpose.msra.mxu0 0.0
        %372 = vmatprep.subr.mxu0 0.0
        %373 = vmatpush1.xpose.msra.mxu0 0.0
        %374 = vmatprep.subr.mxu0 0.0
        %375 = vmatpush1.xpose.msra.mxu0 0.0
        %376 = vmatprep.subr.mxu0 0.0
        %377 = vmatpush1.xpose.msra.mxu0 0.0
        %378 = vmatprep.subr.mxu0 0.0
        %379 = vmatpush1.xpose.msra.mxu0 0.0
        %380 = vmatprep.subr.mxu0 0.0
        %381 = vmatpush1.xpose.msra.mxu0 0.0
        %382 = vmatprep.subr.mxu0 0.0
        %383 = vmatpush1.xpose.msra.mxu0 0.0
        %384 = vmatprep.subr.mxu0 0.0
        %385 = vmatpush1.xpose.msra.mxu0 0.0
        %386 = vmatprep.subr.mxu0 0.0
        %387 = vmatpush1.xpose.msra.mxu0 0.0
        %388 = vmatprep.subr.mxu0 0.0
        %389 = vmatpush1.xpose.msra.mxu0 0.0
        %390 = vmatprep.subr.mxu0 0.0
        %391 = vmatpush1.xpose.msra.mxu0 0.0
        %392 = vmatprep.subr.mxu0 0.0
        %393 = vmatpush1.xpose.msra.mxu0 0.0
        %394 = vmatprep.subr.mxu0 0.0
        %395 = vmatpush1.xpose.msra.mxu0 0.0
        %396 = vmatprep.subr.mxu0 0.0
        %397 = vmatpush1.xpose.msra.mxu0 0.0
        %398 = vmatprep.mubr.f32.mxu0 0.0
        %399 = vmatmul.mubr.f32.gmra.mrb[0].mxu0 %v323
        %v400 = vpop.f32.mrb[0].mxu0
        %v401 = vadd.f32 0.0, %v400
        %v402 = vpop.f32.mrb[0].mxu0
        %403 = vmatprep.mubr.f32.mxu0 0.0
        %404 = vmatmul.mubr.f32.gmra.mrb[0].mxu0 %v326
        %v405 = vpop.f32.mrb[0].mxu0
        %v406 = vadd.f32 0.0, %v405
        %v407 = vpop.f32.mrb[0].mxu0
        %408 = vdwg.mxu0
        %v409 = vld [vmem:[#allocation2] sm:$0xff]
        %v410 = vld [vmem:[#allocation2 + $0x8] sm:$0xff]
        %vm411 = vcmask 130048
        %v412 = vsel %vm411, %v401, -inf
        %413 = vmax.xlane.f32.xlu0 %v412
        %v414 = vpop.xlane.xlu0 %413
        %v415 = vsel %vm411, %v406, -inf
        %416 = vmax.xlane.f32.xlu0 %v415
        %v417 = vpop.xlane.xlu0 %416
        %v418 = vmax.f32 %v409, %v414
        %v419 = vmax.f32 %v410, %v417
        %v420 = vsub.f32 %v409, %v418
        %v421 = vsub.f32 %v410, %v419
        %v422 = vmul.f32 %v420, 1.442695
        %v423 = vpow.pop %v422
        %v424 = vmul.f32 %v421, 1.442695
        %v425 = vpow.pop %v424
        %427 = vset.pattern.permute.xlu0 0
        %428 = vperm.xlu0 %427, %v418
        %v429 = vpop.permute.xlu0 %428
        %432 = vset.pattern.permute.xlu0 0
        %433 = vperm.xlu0 %432, %v419
        %v434 = vpop.permute.xlu0 %433
        %v436 = vsub.f32 %v401, %v429
        %v437 = vsub.f32 %v406, %v434
        %v438 = vmul.f32 %v436, 1.442695
        %v439 = vpow.pop %v438
        %v440 = vmul.f32 %v437, 1.442695
        %v441 = vpow.pop %v440
        %v442 = vld [vmem:[#allocation3] sm:$0xff]
        %v443 = vld [vmem:[#allocation3 + $0x8] sm:$0xff]
        %v444 = vmul.f32 %v423, %v442
        %v445 = vmul.f32 %v425, %v443
        %v446 = vsel %vm411, %v439, 0.0
        %447 = vadd.xlane.f32.xlu0 %v446
        %v448 = vpop.xlane.xlu0 %447
        %v449 = vsel %vm411, %v441, 0.0
        %450 = vadd.xlane.f32.xlu0 %v449
        %v451 = vpop.xlane.xlu0 %450
        %v452 = vadd.f32 %v444, %v448
        %v453 = vadd.f32 %v445, %v451
        %vm454 = vcmask 7168
        %455 = vst.msk [vmem:[#allocation3] sm:$0xff] %vm454, %v452
        %456 = vst.msk [vmem:[#allocation3 + $0x8] sm:$0xff] %vm454, %v453
        %v457 = vld [vmem:[#allocation4] sm:$0xff]
        %v458 = vld [vmem:[#allocation4 + $0x8] sm:$0xff]
        %460 = vset.pattern.permute.xlu0 0
        %461 = vperm.xlu0 %460, %v423
        %v462 = vpop.permute.xlu0 %461
        %465 = vset.pattern.permute.xlu0 0
        %466 = vperm.xlu0 %465, %v425
        %v467 = vpop.permute.xlu0 %466
        %v469 = vmul.f32 %v462, %v457
        %v470 = vmul.f32 %v467, %v458
        %v471 = vld [vmem:[%s266] sm:$0xff]
        %v472 = vld [vmem:[%s266 + $0x8] sm:$0xff]
        %v474 = vsel %vm411, %v439, 0
        %v477 = vsel %vm411, %v441, 0
        %479 = vmatprep.subr.mxu0 0.0
        %480 = vmatpush1.msra.mxu0 %v471
        %481 = vmatprep.subr.mxu0 0.0
        %482 = vmatpush1.msra.mxu0 %v472
        %483 = vmatprep.subr.mxu0 0.0
        %484 = vmatpush1.msra.mxu0 0.0
        %485 = vmatprep.subr.mxu0 0.0
        %486 = vmatpush1.msra.mxu0 0.0
        %487 = vmatprep.subr.mxu0 0.0
        %488 = vmatpush1.msra.mxu0 0.0
        %489 = vmatprep.subr.mxu0 0.0
        %490 = vmatpush1.msra.mxu0 0.0
        %491 = vmatprep.subr.mxu0 0.0
        %492 = vmatpush1.msra.mxu0 0.0
        %493 = vmatprep.subr.mxu0 0.0
        %494 = vmatpush1.msra.mxu0 0.0
        %495 = vmatprep.subr.mxu0 0.0
        %496 = vmatpush1.msra.mxu0 0.0
        %497 = vmatprep.subr.mxu0 0.0
        %498 = vmatpush1.msra.mxu0 0.0
        %499 = vmatprep.subr.mxu0 0.0
        %500 = vmatpush1.msra.mxu0 0.0
        %501 = vmatprep.subr.mxu0 0.0
        %502 = vmatpush1.msra.mxu0 0.0
        %503 = vmatprep.subr.mxu0 0.0
        %504 = vmatpush1.msra.mxu0 0.0
        %505 = vmatprep.subr.mxu0 0.0
        %506 = vmatpush1.msra.mxu0 0.0
        %507 = vmatprep.subr.mxu0 0.0
        %508 = vmatpush1.msra.mxu0 0.0
        %509 = vmatprep.subr.mxu0 0.0
        %510 = vmatpush1.msra.mxu0 0.0
        %511 = vmatprep.subr.mxu0 0.0
        %512 = vmatpush1.msra.mxu0 0.0
        %513 = vmatprep.subr.mxu0 0.0
        %514 = vmatpush1.msra.mxu0 0.0
        %515 = vmatprep.subr.mxu0 0.0
        %516 = vmatpush1.msra.mxu0 0.0
        %517 = vmatprep.subr.mxu0 0.0
        %518 = vmatpush1.msra.mxu0 0.0
        %519 = vmatprep.subr.mxu0 0.0
        %520 = vmatpush1.msra.mxu0 0.0
        %521 = vmatprep.subr.mxu0 0.0
        %522 = vmatpush1.msra.mxu0 0.0
        %523 = vmatprep.subr.mxu0 0.0
        %524 = vmatpush1.msra.mxu0 0.0
        %525 = vmatprep.subr.mxu0 0.0
        %526 = vmatpush1.msra.mxu0 0.0
        %527 = vmatprep.subr.mxu0 0.0
        %528 = vmatpush1.msra.mxu0 0.0
        %529 = vmatprep.subr.mxu0 0.0
        %530 = vmatpush1.msra.mxu0 0.0
        %531 = vmatprep.subr.mxu0 0.0
        %532 = vmatpush1.msra.mxu0 0.0
        %533 = vmatprep.subr.mxu0 0.0
        %534 = vmatpush1.msra.mxu0 0.0
        %535 = vmatprep.subr.mxu0 0.0
        %536 = vmatpush1.msra.mxu0 0.0
        %537 = vmatprep.subr.mxu0 0.0
        %538 = vmatpush1.msra.mxu0 0.0
        %539 = vmatprep.subr.mxu0 0.0
        %540 = vmatpush1.msra.mxu0 0.0
        %541 = vmatprep.subr.mxu0 0.0
        %542 = vmatpush1.msra.mxu0 0.0
        %543 = vmatprep.mubr.f32.mxu0 0.0
        %544 = vmatmul.mubr.f32.gmra.mrb[0].mxu0 %v474
        %v545 = vpop.f32.mrb[0].mxu0
        %v546 = vadd.f32 0.0, %v545
        %v547 = vpop.f32.mrb[0].mxu0
        %548 = vmatprep.mubr.f32.mxu0 0.0
        %549 = vmatmul.mubr.f32.gmra.mrb[0].mxu0 %v477
        %v550 = vpop.f32.mrb[0].mxu0
        %v551 = vadd.f32 0.0, %v550
        %v552 = vpop.f32.mrb[0].mxu0
        %553 = vdwg.mxu0
        %v554 = vadd.f32 %v469, %v546
        %v555 = vadd.f32 %v470, %v551
        %556 = vst.msk [vmem:[#allocation4] sm:$0xff] %vm321, %v554
        %557 = vst.msk [vmem:[#allocation4 + $0x8] sm:$0xff] %vm321, %v555
        %558 = vst.msk [vmem:[#allocation2] sm:$0xff] %vm454, %v418
        %559 = vst.msk [vmem:[#allocation2 + $0x8] sm:$0xff] %vm454, %v419
        // Predicated region
        $region49: #{tpu_custom_call.1} parent=31 // pred_check
          %p560 = pneg %p303
        $region50: #{tpu_custom_call.1} parent=31 // pred_check_branch
          %562 = sbr.rel (%p560) target = $region52
        $region51: #{tpu_custom_call.1} parent=31 // pred_region
          %v563 = vld [vmem:[#allocation3] sm:$0xff]
          %v564 = vld [vmem:[#allocation3 + $0x8] sm:$0xff]
          %v565 = vrcp.pop %v563
          %v566 = vrcp.pop %v564
          %v567 = vld [vmem:[#allocation4] sm:$0xff]
          %v568 = vld [vmem:[#allocation4 + $0x8] sm:$0xff]
          %570 = vset.pattern.permute.xlu0 0
          %571 = vperm.xlu0 %570, %v565
          %v572 = vpop.permute.xlu0 %571
          %575 = vset.pattern.permute.xlu0 0
          %576 = vperm.xlu0 %575, %v566
          %v577 = vpop.permute.xlu0 %576
          %v579 = vmul.f32 %v567, %v572
          %v580 = vmul.f32 %v568, %v577
          %581 = vst.msk [vmem:[%s298] sm:$0xff] %vm321, %v579
          %582 = vst.msk [vmem:[%s298 + $0x8] sm:$0xff] %vm321, %v580
        $region52: #{tpu_custom_call.1} parent=31 // pred_fallthru
          _
        %s583 = sand.u32 %s136, 1
        %s584 = scalar_lea.sflag [#allocation7], %s583
        %s585 = sand.u32 %s136, 1
        %s586 = smul.addr %s585, 16
        %s587 = scalar_lea.vmem [#allocation11], %s586
        // Predicated region
        $region53: #{tpu_custom_call.1} parent=31 // pred_check
          %p588 = pneg %p146
        $region54: #{tpu_custom_call.1} parent=31 // pred_check_branch
          %590 = sbr.rel (%p588) target = $region56
        $region55: #{tpu_custom_call.1} parent=31 // pred_region
          %s591 = smul.u32 2, %s29
          %s593 = ssub.s32 256, 256
          %594 = vsyncadd %s584, %s593
          %s595 = smul.addr %s28, 2
          %s596 = sadd.s32 %s591, %s595
          %s597 = smul.addr %s596, 128
          %s598 = scalar_lea.hbm %s3, %s597
          %s599 = sshll.u32 %s587, 4
          %s600 = int_to_ptr.vmem [resolvable:$true] %s599
          %605 = dma.vmem_to_hbm [thread:$0]  %s600, 256, %s598, %s584, 128, 128, 8
        $region56: #{tpu_custom_call.1} parent=31 // pred_fallthru
          _
      $region32: #{tpu_custom_call.1} parent=5 // pred_fallthru
        _
      %p606 = scmp.le.s32.totalorder 2, %s18
      // Predicated region
      $region57: #{tpu_custom_call.1} parent=5 // pred_check
        %p607 = pneg %p606
      $region58: #{tpu_custom_call.1} parent=5 // pred_check_branch
        %609 = sbr.rel (%p607) target = $region60
      $region59: #{tpu_custom_call.1} parent=5 // pred_region
        %s610 = ssub.s32 %s18, 2
        // Predicated region
        $region61: #{tpu_custom_call.1} parent=59 // pred_check
          %p611 = pneg %p152
        $region62: #{tpu_custom_call.1} parent=59 // pred_check_branch
          %613 = sbr.rel (%p611) target = $region64
        $region63: #{tpu_custom_call.1} parent=59 // pred_region
          %s614 = sand.u32 %s137, 1
          %s615 = scalar_lea.sflag [#allocation7], %s614
          %s616 = sand.u32 %s137, 1
          %s617 = smul.addr %s616, 16
          %s618 = scalar_lea.vmem [#allocation11], %s617
          %619 = dma.done %s615, 256
        $region64: #{tpu_custom_call.1} parent=59 // pred_fallthru
          _
      $region60: #{tpu_custom_call.1} parent=5 // pred_fallthru
        _
    $region6: #{tpu_custom_call.1} parent=1 // loop_footer
      %s22 = sadd.s32 1, %s18
    $region7: #{tpu_custom_call.1} parent=1 // loop_footer_branch
      %17 = sbr.rel target = $region3
    $region8: #{tpu_custom_call.1} parent=1 // loop_exit
      _
    %620 = vsyncpa [#allocation6], 1
    %s621 = scalar_lea.sflag [#allocation6], 1
    %622 = vsyncpa %s621, 1
    %623 = vsyncpa [#allocation9], 1
    %s624 = scalar_lea.sflag [#allocation9], 1
    %625 = vsyncpa %s624, 1
    %626 = vsyncpa [#allocation7], 1
    %s627 = scalar_lea.sflag [#allocation7], 1
    %628 = vsyncpa %s627, 1

</llo_original>
